<compile_context>
chip_gen: v7x
topology: tpu7x:2x2x1
jax: 0.10.0
libtpu: 0.0.40
codegen_flags: <defaults>
</compile_context>

<pallas_src>
import functools
import math

import jax
import jax.numpy as jnp
from jax.experimental import pallas as pl
from jax.experimental.pallas import tpu as pltpu

_VMEM_LIMIT = 48 * 1024 * 1024  # < v7x 64 MiB physical; plenty of headroom on v5e/v6e


def _pick_tile(m, target=512):
    """Largest divisor of m that is <= target and a multiple of 8 (or m itself)."""
    if m <= target:
        return m
    for t in range(target, 7, -1):
        if m % t == 0 and t % 8 == 0:
            return t
    return m


def _graphs_per_block(B, rows, target_rows=512, align=1):
    """Largest divisor G of B with G*rows <= target_rows.

    Grid steps are a serial loop on v5e/v6e, and the GCN grid axis is 'arbitrary'
    (resident BN accumulators) anyway, so we simply maximize the per-step M.
    `align` guards the in-kernel (G,rows,*) <-> (G*rows,*) reshapes (rows % 8 == 0).
    """
    if align > 1 and rows % align != 0:
        return 1
    best = 1
    for g in range(1, B + 1):
        if B % g == 0 and g * rows <= target_rows:
            best = g
    return best


# ----------------------------------------------------------------------------
# Kernel 1: fused GCN layer
#     out = D^-1/2 (A+I) D^-1/2 @ X @ W + bias         (aggregate-first ordering)
#   + resident per-channel sum / sum-of-squares accumulators for the following BN.
# Weight & bias stay VMEM-resident via constant index_maps.
# ----------------------------------------------------------------------------
def _gcn_layer_kernel(a_ref, x_ref, w_ref, b_ref, o_ref, sum_ref, sq_ref, *, G, N):
    Fin, C = w_ref.shape
    M = G * N

    @pl.when(pl.program_id(0) == 0)
    def _():
        sum_ref[...] = jnp.zeros_like(sum_ref)
        sq_ref[...] = jnp.zeros_like(sq_ref)

    # --- normalization of (A + I); symmetric adjacency => deg = row-sum only --------
    row = jax.lax.broadcasted_iota(jnp.int32, (N, N), 0)
    col = jax.lax.broadcasted_iota(jnp.int32, (N, N), 1)
    eye = (row == col).astype(jnp.float32)
    a = a_ref[...].astype(jnp.float32) + eye[None, :, :]          # (G, N, N)
    dr = jax.lax.rsqrt(jnp.sum(a, axis=2, keepdims=True))         # (G, N, 1) = D^-1/2

    # --- aggregation (column D^-1/2 folded into X; row D^-1/2 applied after) --------
    xs = (x_ref[...].astype(jnp.float32) * dr).astype(jnp.bfloat16)   # (G, N, Fin)
    a_bf = a.astype(jnp.bfloat16)
    if G == 1:
        agg = jnp.dot(a_bf[0], xs[0], preferred_element_type=jnp.float32)[None]
    else:
        agg = jnp.einsum("gij,gjf->gif", a_bf, xs,
                         preferred_element_type=jnp.float32)          # (G, N, Fin)
    agg = agg * dr                                                     # row scaling, f32
    agg2d = agg.reshape(M, Fin).astype(jnp.bfloat16)

    # --- feature transform: one (M, Fin) x (Fin, C) MXU matmul, f32 accumulation ----
    out = jnp.dot(agg2d, w_ref[...], preferred_element_type=jnp.float32) + b_ref[...]

    # --- fused BatchNorm statistics (saves a full HBM re-read of the activation) ----
    sum_ref[...] += jnp.sum(out, axis=0, keepdims=True)
    sq_ref[...] += jnp.sum(out * out, axis=0, keepdims=True)

    o_ref[...] = out.reshape(G, N, C).astype(jnp.bfloat16)


def gcn_layer(adj, x, w, b):
    """Returns (out bf16 (B,N,C), channel_sum f32 (1,C), channel_sumsq f32 (1,C))."""
    B, N, Fin = x.shape
    C = w.shape[1]
    G = _graphs_per_block(B, N, target_rows=512, align=8)
    flops = 2 * B * N * (N * Fin + Fin * C)
    bytes_accessed = (B * N * N + B * N * Fin + B * N * C) * 2 + Fin * C * 2 + 3 * C * 4
    return pl.pallas_call(
        functools.partial(_gcn_layer_kernel, G=G, N=N),
        out_shape=(jax.ShapeDtypeStruct((B, N, C), jnp.bfloat16),
                   jax.ShapeDtypeStruct((1, C), jnp.float32),
                   jax.ShapeDtypeStruct((1, C), jnp.float32)),
        grid=(B // G,),
        in_specs=[
            pl.BlockSpec((G, N, N), lambda i: (i, 0, 0)),
            pl.BlockSpec((G, N, Fin), lambda i: (i, 0, 0)),
            pl.BlockSpec((Fin, C), lambda i: (0, 0)),        # resident weight (bf16)
            pl.BlockSpec((1, C), lambda i: (0, 0)),          # resident bias
        ],
        out_specs=(pl.BlockSpec((G, N, C), lambda i: (i, 0, 0)),
                   pl.BlockSpec((1, C), lambda i: (0, 0)),   # resident BN accumulators
                   pl.BlockSpec((1, C), lambda i: (0, 0))),
        compiler_params=pltpu.CompilerParams(
            dimension_semantics=("arbitrary",),              # accumulators span the grid
            vmem_limit_bytes=_VMEM_LIMIT),
        cost_estimate=pl.CostEstimate(flops=flops, transcendentals=B * N,
                                      bytes_accessed=bytes_accessed),
    )(adj.astype(jnp.bfloat16), x.astype(jnp.bfloat16),
      w.astype(jnp.bfloat16), b.reshape(1, C).astype(jnp.float32))


# ----------------------------------------------------------------------------
# Kernel 2: BatchNorm1d apply (batch stats, eps=1e-5) fused with ReLU, M-tiled.
# Statistics come from the GCN-layer epilogue (no separate stats pass).
# ----------------------------------------------------------------------------
def _bn_apply_kernel(x_ref, sum_ref, sq_ref, g_ref, b_ref, o_ref, *, count):
    inv_n = 1.0 / count
    mean = sum_ref[...] * inv_n
    var = sq_ref[...] * inv_n - mean * mean
    scale = g_ref[...] * jax.lax.rsqrt(var + 1e-5)
    shift = b_ref[...] - mean * scale
    y = x_ref[...].astype(jnp.float32) * scale + shift
    o_ref[...] = jnp.maximum(y, 0.0).astype(o_ref.dtype)


def batchnorm_relu(x, sums, sqs, gamma, beta, tile_m=512):
    M, C = x.shape
    tm = _pick_tile(M, tile_m)
    return pl.pallas_call(
        functools.partial(_bn_apply_kernel, count=float(M)),
        out_shape=jax.ShapeDtypeStruct((M, C), jnp.bfloat16),
        grid=(M // tm,),
        in_specs=[pl.BlockSpec((tm, C), lambda i: (i, 0)),
                  pl.BlockSpec((1, C), lambda i: (0, 0)),
                  pl.BlockSpec((1, C), lambda i: (0, 0)),
                  pl.BlockSpec((1, C), lambda i: (0, 0)),
                  pl.BlockSpec((1, C), lambda i: (0, 0))],
        out_specs=pl.BlockSpec((tm, C), lambda i: (i, 0)),
        compiler_params=pltpu.CompilerParams(
            dimension_semantics=("parallel",),
            vmem_limit_bytes=_VMEM_LIMIT),
    )(x, sums, sqs, gamma.reshape(1, C), beta.reshape(1, C))


# ----------------------------------------------------------------------------
# Kernel 3: TopK projection score as a lane-dense VPU reduction, several graphs/step
# ----------------------------------------------------------------------------
def _score_kernel(x_ref, p_ref, o_ref):
    o_ref[...] = jnp.sum(x_ref[...].astype(jnp.float32) * p_ref[...], axis=-1)


def topk_score(x, p_norm):
    B, n, C = x.shape
    Gb = _graphs_per_block(B, n, target_rows=1024)
    return pl.pallas_call(
        _score_kernel,
        out_shape=jax.ShapeDtypeStruct((B, n), jnp.float32),
        grid=(B // Gb,),
        in_specs=[pl.BlockSpec((Gb, n, C), lambda i: (i, 0, 0)),
                  pl.BlockSpec((1, 1, C), lambda i: (0, 0, 0))],
        out_specs=pl.BlockSpec((Gb, n), lambda i: (i, 0)),
        compiler_params=pltpu.CompilerParams(
            dimension_semantics=("parallel",),
            vmem_limit_bytes=_VMEM_LIMIT),
    )(x, p_norm.reshape(1, 1, C))


# ----------------------------------------------------------------------------
# Kernel 4: TopK gating (x * tanh(score)) fused with global_mean_pool.
# Pool-only variant avoids writing the unused gated tensor in the 2nd stage.
# ----------------------------------------------------------------------------
def _gate_pool_kernel(x_ref, s_ref, g_ref, m_ref, *, k):
    g = x_ref[...].astype(jnp.float32) * jnp.tanh(s_ref[...])       # (Gb, k, C)
    g_ref[...] = g.astype(g_ref.dtype)
    m_ref[...] = jnp.sum(g, axis=1) * (1.0 / k)                     # (Gb, C)


def _pool_only_kernel(x_ref, s_ref, m_ref, *, k):
    g = x_ref[...].astype(jnp.float32) * jnp.tanh(s_ref[...])
    m_ref[...] = jnp.sum(g, axis=1) * (1.0 / k)


def gate_and_mean_pool(x_sel, s_sel, need_gated):
    B, k, C = x_sel.shape
    Gb = _graphs_per_block(B, k, target_rows=1024)
    grid = (B // Gb,)
    x_spec = pl.BlockSpec((Gb, k, C), lambda b: (b, 0, 0))
    s_spec = pl.BlockSpec((Gb, k, 1), lambda b: (b, 0, 0))
    pool_spec = pl.BlockSpec((Gb, C), lambda b: (b, 0))
    cp = pltpu.CompilerParams(dimension_semantics=("parallel",),
                              vmem_limit_bytes=_VMEM_LIMIT)
    if need_gated:
        gated, pooled = pl.pallas_call(
            functools.partial(_gate_pool_kernel, k=k),
            out_shape=(jax.ShapeDtypeStruct((B, k, C), jnp.bfloat16),
                       jax.ShapeDtypeStruct((B, C), jnp.float32)),
            grid=grid,
            in_specs=[x_spec, s_spec],
            out_specs=(pl.BlockSpec((Gb, k, C), lambda b: (b, 0, 0)), pool_spec),
            compiler_params=cp,
        )(x_sel, s_sel)
        return gated, pooled
    pooled = pl.pallas_call(
        functools.partial(_pool_only_kernel, k=k),
        out_shape=jax.ShapeDtypeStruct((B, C), jnp.float32),
        grid=grid,
        in_specs=[x_spec, s_spec],
        out_specs=pool_spec,
        compiler_params=cp,
    )(x_sel, s_sel)
    return None, pooled


# ----------------------------------------------------------------------------
# TopKPooling(ratio=0.5) + global_mean_pool.
# top_k selection and index gathers stay in JAX glue (no clean Pallas equivalent).
# ----------------------------------------------------------------------------
def topk_pool_and_mean(x, adj, p, ratio=0.5, need_gated=True):
    B, n, C = x.shape
    k = int(math.ceil(ratio * n))
    p32 = p.astype(jnp.float32)
    p_norm = p32 / jnp.sqrt(jnp.sum(p32 * p32))
    score = topk_score(x, p_norm)                                     # (B, n) f32
    _, idx = jax.lax.top_k(score, k)                                  # (B, k)
    x_sel = jnp.take_along_axis(x, idx[:, :, None], axis=1)           # (B, k, C)
    s_sel = jnp.take_along_axis(score, idx, axis=1)[..., None]        # (B, k, 1)
    gated, pooled = gate_and_mean_pool(x_sel, s_sel, need_gated)
    if need_gated:
        a_sel = jnp.take_along_axis(adj, idx[:, :, None], axis=1)     # rows
        a_sel = jnp.take_along_axis(a_sel, idx[:, None, :], axis=2)   # cols
    else:
        a_sel = None
    return gated, a_sel, pooled


# ----------------------------------------------------------------------------
# Kernel 5: fused readout head:  fc(1024->512) + ReLU + [dropout id] + fc1(512->1)
#           + sigmoid.  fc1 is a lane-dense VPU reduction (no width-1 MXU matmul,
#           no intermediate HBM round-trip of the (M,512) activation).
# ----------------------------------------------------------------------------
def _head_kernel(x_ref, w_ref, b_ref, w1_ref, b1_ref, o_ref):
    h = jnp.dot(x_ref[...].astype(jnp.bfloat16), w_ref[...],
                preferred_element_type=jnp.float32)
    h = jnp.maximum(h + b_ref[...], 0.0)                              # fc + ReLU
    # dropout(0.2): eval-mode identity
    s = jnp.sum(h * w1_ref[...], axis=-1, keepdims=True) + b1_ref[...]
    o_ref[...] = jax.nn.sigmoid(s)


def readout_head(x, fcw, fcb, fc1w, fc1b, tile_m=512):
    M, K = x.shape
    H = fcw.shape[1]
    tm = _pick_tile(M, tile_m)
    return pl.pallas_call(
        _head_kernel,
        out_shape=jax.ShapeDtypeStruct((M, 1), jnp.float32),
        grid=(M // tm,),
        in_specs=[pl.BlockSpec((tm, K), lambda i: (i, 0)),
                  pl.BlockSpec((K, H), lambda i: (0, 0)),             # resident fc weight
                  pl.BlockSpec((1, H), lambda i: (0, 0)),
                  pl.BlockSpec((1, H), lambda i: (0, 0)),             # fc1 weight row
                  pl.BlockSpec((1, 1), lambda i: (0, 0))],
        out_specs=pl.BlockSpec((tm, 1), lambda i: (i, 0)),
        compiler_params=pltpu.CompilerParams(
            dimension_semantics=("parallel",),
            vmem_limit_bytes=_VMEM_LIMIT),
        cost_estimate=pl.CostEstimate(flops=2 * M * K * H + 2 * M * H,
                                      transcendentals=M,
                                      bytes_accessed=M * K * 4 + K * H * 2 + M * 4),
    )(x, fcw.astype(jnp.bfloat16), fcb.reshape(1, H).astype(jnp.float32),
      fc1w.reshape(1, H).astype(jnp.float32), fc1b.reshape(1, 1).astype(jnp.float32))


# ----------------------------------------------------------------------------
# Full forward pass
# ----------------------------------------------------------------------------
def gcn_forward(params, x, adj):
    B, N, _ = x.shape
    C = params["w1"].shape[1]
    adj_bf = adj.astype(jnp.bfloat16)   # 0/1 values exact in bf16; halves adjacency HBM reads

    # GConv1 (A_hat agg + X@W + bias, BN stats fused) -> bn1 -> ReLU
    h, s1, q1 = gcn_layer(adj_bf, x, params["w1"], params["b1"])          # (B, N, C) bf16
    h = batchnorm_relu(h.reshape(B * N, C), s1, q1,
                       params["g1"], params["be1"]).reshape(B, N, C)

    # TopK pool 1 (gated nodes kept for GConv2) + global mean pool
    h, adj1, x1 = topk_pool_and_mean(h, adj_bf, params["p1"], need_gated=True)

    # GConv2 -> bn2 -> ReLU
    B2, N1, _ = h.shape
    h2, s2, q2 = gcn_layer(adj1, h, params["w2"], params["b2"])
    h2 = batchnorm_relu(h2.reshape(B2 * N1, C), s2, q2,
                        params["g2"], params["be2"]).reshape(B2, N1, C)

    # TopK pool 2 (only the pooled readout is needed; no gated writeback)
    _, _, x2 = topk_pool_and_mean(h2, adj1, params["p2"], need_gated=False)

    # readout head (fc + ReLU + dropout(id) + fc1 + sigmoid, fused)
    xr = x1 + x2
    return readout_head(xr, params["fcw"], params["fcb"], params["fc1w"], params["fc1b"])


# ----------------------------------------------------------------------------
# Deterministic parameter initialization (shapes from GCN.__init__)
# ----------------------------------------------------------------------------
def init_params(key, feature, hidden=1024):
    ks = jax.random.split(key, 8)

    def glorot(k, shape):
        s = math.sqrt(6.0 / (shape[0] + shape[1]))
        return jax.random.uniform(k, shape, jnp.float32, -s, s)

    def lin_init(k, fin, fout):
        s = 1.0 / math.sqrt(fin)
        kw, kb = jax.random.split(k)
        return (jax.random.uniform(kw, (fin, fout), jnp.float32, -s, s),
                jax.random.uniform(kb, (fout,), jnp.float32, -s, s))

    p = {}
    p["w1"] = glorot(ks[0], (feature, hidden)); p["b1"] = jnp.zeros((hidden,), jnp.float32)
    p["g1"] = jnp.ones((hidden,), jnp.float32); p["be1"] = jnp.zeros((hidden,), jnp.float32)
    p["w2"] = glorot(ks[1], (hidden, hidden));  p["b2"] = jnp.zeros((hidden,), jnp.float32)
    p["g2"] = jnp.ones((hidden,), jnp.float32); p["be2"] = jnp.zeros((hidden,), jnp.float32)
    p["p1"] = jax.random.uniform(ks[2], (hidden,), jnp.float32, -0.1, 0.1)
    p["p2"] = jax.random.uniform(ks[3], (hidden,), jnp.float32, -0.1, 0.1)
    p["fcw"], p["fcb"] = lin_init(ks[4], hidden, 512)
    p["fc1w"], p["fc1b"] = lin_init(ks[5], 512, 1)
    return p


if __name__ == "__main__":
    B, N, FEATURE = 2, 16, 16
    key = jax.random.PRNGKey(0)
    k_x, k_a, k_p = jax.random.split(key, 3)

    # node features
    x = jax.random.normal(k_x, (B, N, FEATURE), jnp.float32)

    # random symmetric 0/1 adjacency, no self-loops
    r = jax.random.uniform(k_a, (B, N, N)) < 0.3
    adj = jnp.logical_or(r, jnp.transpose(r, (0, 2, 1)))
    adj = jnp.where(jnp.eye(N, dtype=bool)[None], False, adj).astype(jnp.float32)

    params = init_params(k_p, FEATURE)

    out = gcn_forward(params, x, adj)          # (B, 1) sigmoid probabilities
    jax.block_until_ready(out)
    assert out.shape == (B, 1)
    print("KERNEL_OK")
</pallas_src>

<mosaic_0001>
module attributes {stable_mosaic.version = 11 : i64} {
  func.func @_gcn_layer_kernel(%arg0: i32, %arg1: memref<2x16x16xbf16, #tpu.memory_space<vmem>>, %arg2: memref<2x16x16xbf16, #tpu.memory_space<vmem>>, %arg3: memref<16x1024xbf16, #tpu.memory_space<vmem>>, %arg4: memref<1x1024xf32, #tpu.memory_space<vmem>>, %arg5: memref<2x16x1024xbf16, #tpu.memory_space<vmem>>, %arg6: memref<1x1024xf32, #tpu.memory_space<vmem>>, %arg7: memref<1x1024xf32, #tpu.memory_space<vmem>>) attributes {dimension_semantics = [#tpu.dimension_semantics<arbitrary>], iteration_bounds = array<i64: 1>, scalar_prefetch = 0 : i64, scratch_operands = 0 : i64, tpu.core_type = #tpu.core_type<tc>, window_params = [{transform_indices = @transform_0, window_bounds = array<i64: 2, 16, 16>}, {transform_indices = @transform_1, window_bounds = array<i64: 2, 16, 16>}, {pipeline_mode = #tpu.pipeline_mode<synchronous>, transform_indices = @transform_2, window_bounds = array<i64: 16, 1024>}, {pipeline_mode = #tpu.pipeline_mode<synchronous>, transform_indices = @transform_3, window_bounds = array<i64: 1, 1024>}, {transform_indices = @transform_4, window_bounds = array<i64: 2, 16, 1024>}, {pipeline_mode = #tpu.pipeline_mode<synchronous>, transform_indices = @transform_5, window_bounds = array<i64: 1, 1024>}, {pipeline_mode = #tpu.pipeline_mode<synchronous>, transform_indices = @transform_6, window_bounds = array<i64: 1, 1024>}]} {
    %c0_i32 = arith.constant 0 : i32
    %0 = arith.cmpi eq, %arg0, %c0_i32 : i32
    %1 = arith.extui %0 : i1 to i32
    %c0_i32_0 = arith.constant 0 : i32
    %2 = arith.cmpi ne, %1, %c0_i32_0 : i32
    scf.if %2 {
      %cst_25 = arith.constant 0.000000e+00 : f32
      %46 = vector.broadcast %cst_25 : f32 to vector<1x1024xf32>
      %c0_26 = arith.constant 0 : index
      %c0_27 = arith.constant 0 : index
      %47 = vector.load %arg6[%c0_26, %c0_27] : memref<1x1024xf32, #tpu.memory_space<vmem>>, vector<1x1024xf32>
      tpu.vector_store %arg6[%c0_26, %c0_27], %46 {strides = array<i32>} : memref<1x1024xf32, #tpu.memory_space<vmem>>, vector<1x1024xf32>,
      %cst_28 = arith.constant 0.000000e+00 : f32
      %48 = vector.broadcast %cst_28 : f32 to vector<1x1024xf32>
      %c0_29 = arith.constant 0 : index
      %c0_30 = arith.constant 0 : index
      %49 = vector.load %arg7[%c0_29, %c0_30] : memref<1x1024xf32, #tpu.memory_space<vmem>>, vector<1x1024xf32>
      tpu.vector_store %arg7[%c0_29, %c0_30], %48 {strides = array<i32>} : memref<1x1024xf32, #tpu.memory_space<vmem>>, vector<1x1024xf32>,
    } else {
    }
    %3 = tpu.iota {dimensions = array<i32: 0>} : vector<16x16xi32>
    %4 = tpu.iota {dimensions = array<i32: 1>} : vector<16x16xi32>
    %5 = arith.cmpi eq, %3, %4 : vector<16x16xi32>
    %6 = arith.extui %5 : vector<16x16xi1> to vector<16x16xi32>
    %7 = arith.sitofp %6 : vector<16x16xi32> to vector<16x16xf32>
    %c0 = arith.constant 0 : index
    %c0_1 = arith.constant 0 : index
    %c0_2 = arith.constant 0 : index
    %8 = vector.load %arg1[%c0, %c0_1, %c0_2] : memref<2x16x16xbf16, #tpu.memory_space<vmem>>, vector<2x16x16xbf16>
    %9 = arith.extf %8 : vector<2x16x16xbf16> to vector<2x16x16xf32>
    %10 = vector.shape_cast %7 : vector<16x16xf32> to vector<1x16x16xf32>
    %11 = vector.broadcast %10 : vector<1x16x16xf32> to vector<2x16x16xf32>
    %12 = arith.addf %9, %11 : vector<2x16x16xf32>
    %cst = arith.constant dense<0.000000e+00> : vector<2x16xf32>
    %13 = vector.multi_reduction <add>, %12, %cst [2] : vector<2x16x16xf32> to vector<2x16xf32>
    %14 = vector.shape_cast %13 : vector<2x16xf32> to vector<2x16x1xf32>
    %15 = math.rsqrt %14 : vector<2x16x1xf32>
    %c0_3 = arith.constant 0 : index
    %c0_4 = arith.constant 0 : index
    %c0_5 = arith.constant 0 : index
    %16 = vector.load %arg2[%c0_3, %c0_4, %c0_5] : memref<2x16x16xbf16, #tpu.memory_space<vmem>>, vector<2x16x16xbf16>
    %17 = arith.extf %16 : vector<2x16x16xbf16> to vector<2x16x16xf32>
    %18 = vector.broadcast %15 : vector<2x16x1xf32> to vector<2x16x16xf32>
    %19 = arith.mulf %17, %18 : vector<2x16x16xf32>
    %20 = arith.truncf %19 : vector<2x16x16xf32> to vector<2x16x16xbf16>
    %21 = arith.truncf %12 : vector<2x16x16xf32> to vector<2x16x16xbf16>
    "tpu.trace_start"() <{level = 10 : i32, message = "gij,gjf->gif"}> : () -> ()
    %cst_6 = arith.constant dense<0.000000e+00> : vector<2x16x16xf32>
    %22 = tpu.matmul %21, %20, %cst_6 {dimension_numbers = #tpu.dot_dimension_numbers<[2], [1], [1], [2], [0, 0, 0, 1, 1, 2], [0], [0]>} : vector<2x16x16xbf16>, vector<2x16x16xbf16>, vector<2x16x16xf32> -> vector<2x16x16xf32>
    "tpu.trace_stop"() : () -> ()
    %23 = vector.broadcast %15 : vector<2x16x1xf32> to vector<2x16x16xf32>
    %24 = arith.mulf %22, %23 : vector<2x16x16xf32>
    %25 = vector.shape_cast %24 : vector<2x16x16xf32> to vector<32x16xf32>
    %26 = arith.truncf %25 : vector<32x16xf32> to vector<32x16xbf16>
    %c0_7 = arith.constant 0 : index
    %c0_8 = arith.constant 0 : index
    %27 = vector.load %arg3[%c0_7, %c0_8] : memref<16x1024xbf16, #tpu.memory_space<vmem>>, vector<16x1024xbf16>
    %cst_9 = arith.constant dense<0.000000e+00> : vector<32x1024xf32>
    %28 = tpu.matmul %26, %27, %cst_9 {dimension_numbers = #tpu.dot_dimension_numbers<[1], [0], [0], [1], [0, 0, 1, 1], [], []>} : vector<32x16xbf16>, vector<16x1024xbf16>, vector<32x1024xf32> -> vector<32x1024xf32>
    %c0_10 = arith.constant 0 : index
    %c0_11 = arith.constant 0 : index
    %29 = vector.load %arg4[%c0_10, %c0_11] : memref<1x1024xf32, #tpu.memory_space<vmem>>, vector<1x1024xf32>
    %30 = vector.broadcast %29 : vector<1x1024xf32> to vector<32x1024xf32>
    %31 = arith.addf %28, %30 : vector<32x1024xf32>
    %c0_12 = arith.constant 0 : index
    %c0_13 = arith.constant 0 : index
    %32 = vector.load %arg6[%c0_12, %c0_13] : memref<1x1024xf32, #tpu.memory_space<vmem>>, vector<1x1024xf32>
    %cst_14 = arith.constant dense<0.000000e+00> : vector<1024xf32>
    %33 = vector.multi_reduction <add>, %31, %cst_14 [0] : vector<32x1024xf32> to vector<1024xf32>
    %34 = vector.shape_cast %33 : vector<1024xf32> to vector<1x1024xf32>
    %35 = arith.addf %32, %34 : vector<1x1024xf32>
    %c0_15 = arith.constant 0 : index
    %c0_16 = arith.constant 0 : index
    %36 = vector.load %arg6[%c0_15, %c0_16] : memref<1x1024xf32, #tpu.memory_space<vmem>>, vector<1x1024xf32>
    tpu.vector_store %arg6[%c0_15, %c0_16], %35 {strides = array<i32>} : memref<1x1024xf32, #tpu.memory_space<vmem>>, vector<1x1024xf32>,
    %c0_17 = arith.constant 0 : index
    %c0_18 = arith.constant 0 : index
    %37 = vector.load %arg7[%c0_17, %c0_18] : memref<1x1024xf32, #tpu.memory_space<vmem>>, vector<1x1024xf32>
    %38 = arith.mulf %31, %31 : vector<32x1024xf32>
    %cst_19 = arith.constant dense<0.000000e+00> : vector<1024xf32>
    %39 = vector.multi_reduction <add>, %38, %cst_19 [0] : vector<32x1024xf32> to vector<1024xf32>
    %40 = vector.shape_cast %39 : vector<1024xf32> to vector<1x1024xf32>
    %41 = arith.addf %37, %40 : vector<1x1024xf32>
    %c0_20 = arith.constant 0 : index
    %c0_21 = arith.constant 0 : index
    %42 = vector.load %arg7[%c0_20, %c0_21] : memref<1x1024xf32, #tpu.memory_space<vmem>>, vector<1x1024xf32>
    tpu.vector_store %arg7[%c0_20, %c0_21], %41 {strides = array<i32>} : memref<1x1024xf32, #tpu.memory_space<vmem>>, vector<1x1024xf32>,
    %43 = vector.shape_cast %31 : vector<32x1024xf32> to vector<2x16x1024xf32>
    %44 = arith.truncf %43 : vector<2x16x1024xf32> to vector<2x16x1024xbf16>
    %c0_22 = arith.constant 0 : index
    %c0_23 = arith.constant 0 : index
    %c0_24 = arith.constant 0 : index
    %45 = vector.load %arg5[%c0_22, %c0_23, %c0_24] : memref<2x16x1024xbf16, #tpu.memory_space<vmem>>, vector<2x16x1024xbf16>
    tpu.vector_store %arg5[%c0_22, %c0_23, %c0_24], %44 {strides = array<i32>} : memref<2x16x1024xbf16, #tpu.memory_space<vmem>>, vector<2x16x1024xbf16>,
    return
  }
  func.func @transform_0(%arg0: i32) -> (i32, i32, i32) {
    %c0_i32 = arith.constant 0 : i32
    %c0_i32_0 = arith.constant 0 : i32
    %c0_i32_1 = arith.constant 0 : i32
    return %arg0, %c0_i32, %c0_i32_0 : i32, i32, i32
  }
  func.func @transform_1(%arg0: i32) -> (i32, i32, i32) {
    %c0_i32 = arith.constant 0 : i32
    %c0_i32_0 = arith.constant 0 : i32
    %c0_i32_1 = arith.constant 0 : i32
    return %arg0, %c0_i32, %c0_i32_0 : i32, i32, i32
  }
  func.func @transform_2(%arg0: i32) -> (i32, i32) {
    %c0_i32 = arith.constant 0 : i32
    %c0_i32_0 = arith.constant 0 : i32
    %c0_i32_1 = arith.constant 0 : i32
    return %c0_i32, %c0_i32_0 : i32, i32
  }
  func.func @transform_3(%arg0: i32) -> (i32, i32) {
    %c0_i32 = arith.constant 0 : i32
    %c0_i32_0 = arith.constant 0 : i32
    %c0_i32_1 = arith.constant 0 : i32
    return %c0_i32, %c0_i32_0 : i32, i32
  }
  func.func @transform_4(%arg0: i32) -> (i32, i32, i32) {
    %c0_i32 = arith.constant 0 : i32
    %c0_i32_0 = arith.constant 0 : i32
    %c0_i32_1 = arith.constant 0 : i32
    return %arg0, %c0_i32, %c0_i32_0 : i32, i32, i32
  }
  func.func @transform_5(%arg0: i32) -> (i32, i32) {
    %c0_i32 = arith.constant 0 : i32
    %c0_i32_0 = arith.constant 0 : i32
    %c0_i32_1 = arith.constant 0 : i32
    return %c0_i32, %c0_i32_0 : i32, i32
  }
  func.func @transform_6(%arg0: i32) -> (i32, i32) {
    %c0_i32 = arith.constant 0 : i32
    %c0_i32_0 = arith.constant 0 : i32
    %c0_i32_1 = arith.constant 0 : i32
    return %c0_i32, %c0_i32_0 : i32, i32
  }
}

</mosaic_0001>

<llo_original>
// kernel: tpu_custom_call.1
$region0: #{tpu_custom_call.1}
  #allocation0 [shape = 'u32[]', space=smem, size = 0x4, offset = 0x4, fixed_abs, tag = 'smem constant byte address 0x4 - core index']
  #allocation1 [shape = 'u32[144,128]{1,0:T(1,128)}', space=vmem, size = 0x12000, scoped, tag = 'internal scratch']
  %s0 = inlined_call_operand.hbm [shape: bf16[2,16,16], index: 0, kind: input, shape index: {}]
  %s1 = inlined_call_operand.hbm [shape: bf16[2,16,16], index: 1, kind: input, shape index: {}]
  %s2 = inlined_call_operand.hbm [shape: bf16[16,1024], index: 2, kind: input, shape index: {}]
  %s3 = inlined_call_operand.vmem [shape: f32[1,1024], index: 3, kind: input, shape index: {}]
  %s4 = inlined_call_operand.hbm [shape: bf16[2,16,1024], index: 4, kind: output, shape index: {0}]
  %s5 = inlined_call_operand.hbm [shape: f32[1,1024], index: 5, kind: output, shape index: {1}]
  %s6 = inlined_call_operand.hbm [shape: f32[1,1024], index: 6, kind: output, shape index: {2}]
  %7 = xla_tuple %s4, %s5, %s6
  %s8 = sld [smem:[#allocation0]]
  $region58: #{tpu_custom_call.1} parent=0
    _
  %s10 = ssub.s32 1, %s8
  %s11 = scalar_select 0, %s10, %s8
  $region1: #{tpu_custom_call.1} parent=0
    #allocation2 [shape = 'u8[8192]{0}', space=vmem, size = 0x2000, scoped, tag = 'input window, operand 0, single buffered']
    #allocation3 [shape = 's32[1]{0}', space=sflag, size = 0x4, scoped, tag = 'scoped memory for tpu_custom_call.1']
    #allocation4 [shape = 's32[1]{0}', space=sflag, size = 0x4, scoped, tag = 'scoped memory for tpu_custom_call.1']
    #allocation5 [shape = 'u8[8192]{0}', space=vmem, size = 0x2000, scoped, tag = 'input window, operand 1, single buffered']
    #allocation6 [shape = 's32[1]{0}', space=sflag, size = 0x4, scoped, tag = 'scoped memory for tpu_custom_call.1']
    #allocation7 [shape = 'u8[32768]{0}', space=vmem, size = 0x8000, scoped, tag = 'input window, operand 2, single buffered']
    #allocation8 [shape = 'u8[65536]{0}', space=vmem, size = 0x10000, scoped, tag = 'output window, operand 0, single buffered']
    #allocation9 [shape = 'u8[4096]{0}', space=vmem, size = 0x1000, scoped, tag = 'output window, operand 1, single buffered']
    #allocation10 [shape = 's32[1]{0}', space=sflag, size = 0x4, scoped, tag = 'scoped memory for tpu_custom_call.1']
    #allocation11 [shape = 'u8[4096]{0}', space=vmem, size = 0x1000, scoped, tag = 'output window, operand 2, single buffered']
    %12 = vsyncpa [#allocation3], 0
    %13 = vsyncpa [#allocation6], 0
    %14 = vsyncpa [#allocation4], 0
    %15 = vsyncpa [#allocation10], 0
    // Predicated region
    $region2: #{tpu_custom_call.1} parent=1 // pred_check
      _
    $region3: #{tpu_custom_call.1} parent=1 // pred_check_branch
      %17 = sbr.rel (0) target = $region5
    $region4: #{tpu_custom_call.1} parent=1 // pred_region
      %s19 = ssub.s32 256, 256
      %20 = vsyncadd [#allocation3], %s19
      %s21 = sshll.u32 [#allocation2], 4
      %s22 = int_to_ptr.vmem [resolvable:$true] %s21
      %27 = dma.hbm_to_vmem [thread:$0]  %s0, 256, %s22, [#allocation3], 64, 64, 4
    $region5: #{tpu_custom_call.1} parent=1 // pred_fallthru
      _
    // Predicated region
    $region6: #{tpu_custom_call.1} parent=1 // pred_check
      _
    $region7: #{tpu_custom_call.1} parent=1 // pred_check_branch
      %29 = sbr.rel (0) target = $region9
    $region8: #{tpu_custom_call.1} parent=1 // pred_region
      %s31 = ssub.s32 256, 256
      %32 = vsyncadd [#allocation6], %s31
      %s33 = sshll.u32 [#allocation5], 4
      %s34 = int_to_ptr.vmem [resolvable:$true] %s33
      %39 = dma.hbm_to_vmem [thread:$0]  %s1, 256, %s34, [#allocation6], 64, 64, 4
    $region9: #{tpu_custom_call.1} parent=1 // pred_fallthru
      _
    // Predicated region
    $region10: #{tpu_custom_call.1} parent=1 // pred_check
      _
    $region11: #{tpu_custom_call.1} parent=1 // pred_check_branch
      %41 = sbr.rel (0) target = $region13
    $region12: #{tpu_custom_call.1} parent=1 // pred_region
      %s43 = ssub.s32 1024, 1024
      %44 = vsyncadd [#allocation6], %s43
      %s45 = sshll.u32 [#allocation7], 4
      %s46 = int_to_ptr.vmem [resolvable:$true] %s45
      %51 = dma.hbm_to_vmem [thread:$0]  %s2, 1024, %s46, [#allocation6], 512, 512, 32
    $region13: #{tpu_custom_call.1} parent=1 // pred_fallthru
      _
    // Predicated region
    $region14: #{tpu_custom_call.1} parent=1 // pred_check
      _
    $region15: #{tpu_custom_call.1} parent=1 // pred_check_branch
      %53 = sbr.rel (0) target = $region17
    $region16: #{tpu_custom_call.1} parent=1 // pred_region
      _
    $region17: #{tpu_custom_call.1} parent=1 // pred_fallthru
      _
    // Predicated region
    $region18: #{tpu_custom_call.1} parent=1 // pred_check
      _
    $region19: #{tpu_custom_call.1} parent=1 // pred_check_branch
      %55 = sbr.rel (0) target = $region21
    $region20: #{tpu_custom_call.1} parent=1 // pred_region
      %56 = dma.done [#allocation3], 256
    $region21: #{tpu_custom_call.1} parent=1 // pred_fallthru
      _
    // Predicated region
    $region22: #{tpu_custom_call.1} parent=1 // pred_check
      _
    $region23: #{tpu_custom_call.1} parent=1 // pred_check_branch
      %58 = sbr.rel (0) target = $region25
    $region24: #{tpu_custom_call.1} parent=1 // pred_region
      %59 = dma.done [#allocation6], 256
    $region25: #{tpu_custom_call.1} parent=1 // pred_fallthru
      _
    // Predicated region
    $region26: #{tpu_custom_call.1} parent=1 // pred_check
      _
    $region27: #{tpu_custom_call.1} parent=1 // pred_check_branch
      %61 = sbr.rel (0) target = $region29
    $region28: #{tpu_custom_call.1} parent=1 // pred_region
      %62 = dma.done [#allocation6], 1024
    $region29: #{tpu_custom_call.1} parent=1 // pred_fallthru
      _
    %p64 = scmp.eq.s32.totalorder 0, 0
    // Predicated region
    $region30: #{tpu_custom_call.1} parent=1 // pred_check
      %p65 = pneg %p64
    $region31: #{tpu_custom_call.1} parent=1 // pred_check_branch
      %67 = sbr.rel (%p65) target = $region33
    $region32: #{tpu_custom_call.1} parent=1 // pred_region
      %68 = vst [vmem:[#allocation9] sm:$0xff] 0.0
      %69 = vst [vmem:[#allocation11] sm:$0xff] 0.0
    $region33: #{tpu_custom_call.1} parent=1 // pred_fallthru
      _
    %v70 = vlaneseq
    %v71 = vshrl.u32 %v70, 7
    %v72 = vadd.s32 %v71, 8
    %v73 = vlaneseq
    %v74 = vand.u32 %v73, 127
    %vm75 = vcmp.eq.s32.totalorder %v71, %v74
    %vm76 = vcmp.eq.s32.totalorder %v72, %v74
    %v77 = vsel %vm75, 1, 0
    %v78 = vsel %vm76, 1, 0
    %v79 = vcvt.s32.f32 %v77
    %v80 = vcvt.s32.f32 %v78
    %v81 = vld [vmem:[#allocation2] sm:$0xf]
    %v82 = vld [vmem:[#allocation2 + $0x4] sm:$0xf]
    %v83 = vld [vmem:[#allocation2 + $0x8] sm:$0xf]
    %v84 = vld [vmem:[#allocation2 + $0xc] sm:$0xf]
    %v85 = vunpack.c.l.bf16 %v81
    %v86 = vunpack.c.l.bf16 %v82
    %v87 = vunpack.c.l.bf16 %v83
    %v88 = vunpack.c.l.bf16 %v84
    %v89 = vadd.f32 %v85, %v79
    %v90 = vadd.f32 %v86, %v80
    %v91 = vadd.f32 %v87, %v79
    %v92 = vadd.f32 %v88, %v80
    %vm93 = vcmask 130048
    %v94 = vsel %vm93, %v89, 0.0
    %95 = vadd.xlane.f32.xlu0 %v94
    %v96 = vpop.xlane.xlu0 %95
    %v97 = vsel %vm93, %v90, 0.0
    %98 = vadd.xlane.f32.xlu0 %v97
    %v99 = vpop.xlane.xlu0 %98
    %v100 = vsel %vm93, %v91, 0.0
    %101 = vadd.xlane.f32.xlu0 %v100
    %v102 = vpop.xlane.xlu0 %101
    %v103 = vsel %vm93, %v92, 0.0
    %104 = vadd.xlane.f32.xlu0 %v103
    %v105 = vpop.xlane.xlu0 %104
    %v106 = vrsqrt.pop %v96
    %v107 = vrsqrt.pop %v99
    %v108 = vrsqrt.pop %v102
    %v109 = vrsqrt.pop %v105
    %v110 = vld [vmem:[#allocation5] sm:$0xf]
    %v111 = vld [vmem:[#allocation5 + $0x4] sm:$0xf]
    %v112 = vld [vmem:[#allocation5 + $0x8] sm:$0xf]
    %v113 = vld [vmem:[#allocation5 + $0xc] sm:$0xf]
    %v114 = vunpack.c.l.bf16 %v110
    %v115 = vunpack.c.l.bf16 %v111
    %v116 = vunpack.c.l.bf16 %v112
    %v117 = vunpack.c.l.bf16 %v113
    %v118 = vmul.f32 %v114, %v106
    %v119 = vmul.f32 %v115, %v107
    %v120 = vmul.f32 %v116, %v108
    %v121 = vmul.f32 %v117, %v109
    %v122 = vpack.c.bf16 %v119, %v118
    %v123 = vpack.c.bf16 %v121, %v120
    %v124 = vpack.c.bf16 %v90, %v89
    %v125 = vpack.c.bf16 %v92, %v91
    %v127 = vsel %vm93, %v124, 0
    %129 = vmatprep.subr.bf16.mxu0 0
    %130 = vmatpush1.bf16.msra.mxu0 %v122
    %131 = vmatprep.subr.bf16.mxu0 0
    %132 = vmatpush1.bf16.msra.mxu0 0
    %133 = vmatprep.subr.bf16.mxu0 0
    %134 = vmatpush1.bf16.msra.mxu0 0
    %135 = vmatprep.subr.bf16.mxu0 0
    %136 = vmatpush1.bf16.msra.mxu0 0
    %137 = vmatprep.subr.bf16.mxu0 0
    %138 = vmatpush1.bf16.msra.mxu0 0
    %139 = vmatprep.subr.bf16.mxu0 0
    %140 = vmatpush1.bf16.msra.mxu0 0
    %141 = vmatprep.subr.bf16.mxu0 0
    %142 = vmatpush1.bf16.msra.mxu0 0
    %143 = vmatprep.subr.bf16.mxu0 0
    %144 = vmatpush1.bf16.msra.mxu0 0
    %145 = vmatprep.subr.bf16.mxu0 0
    %146 = vmatpush1.bf16.msra.mxu0 0
    %147 = vmatprep.subr.bf16.mxu0 0
    %148 = vmatpush1.bf16.msra.mxu0 0
    %149 = vmatprep.subr.bf16.mxu0 0
    %150 = vmatpush1.bf16.msra.mxu0 0
    %151 = vmatprep.subr.bf16.mxu0 0
    %152 = vmatpush1.bf16.msra.mxu0 0
    %153 = vmatprep.subr.bf16.mxu0 0
    %154 = vmatpush1.bf16.msra.mxu0 0
    %155 = vmatprep.subr.bf16.mxu0 0
    %156 = vmatpush1.bf16.msra.mxu0 0
    %157 = vmatprep.subr.bf16.mxu0 0
    %158 = vmatpush1.bf16.msra.mxu0 0
    %159 = vmatprep.subr.bf16.mxu0 0
    %160 = vmatpush1.bf16.msra.mxu0 0
    %161 = vmatprep.mubr.bf16.mxu0 0
    %162 = vmatmul.mubr.bf16.gmra.mrb[0].mxu0 %v127
    %v163 = vpop.f32.mrb[0].mxu0
    %v164 = vadd.f32 0.0, %v163
    %v165 = vpop.f32.mrb[0].mxu0
    %v166 = vpop.f32.mrb[0].mxu0
    %v167 = vadd.f32 0.0, %v166
    %v168 = vpop.f32.mrb[0].mxu0
    %169 = vdwg.mxu0
    %v171 = vsel %vm93, %v125, 0
    %173 = vmatprep.subr.bf16.mxu0 0
    %174 = vmatpush1.bf16.msra.mxu0 %v123
    %175 = vmatprep.subr.bf16.mxu0 0
    %176 = vmatpush1.bf16.msra.mxu0 0
    %177 = vmatprep.subr.bf16.mxu0 0
    %178 = vmatpush1.bf16.msra.mxu0 0
    %179 = vmatprep.subr.bf16.mxu0 0
    %180 = vmatpush1.bf16.msra.mxu0 0
    %181 = vmatprep.subr.bf16.mxu0 0
    %182 = vmatpush1.bf16.msra.mxu0 0
    %183 = vmatprep.subr.bf16.mxu0 0
    %184 = vmatpush1.bf16.msra.mxu0 0
    %185 = vmatprep.subr.bf16.mxu0 0
    %186 = vmatpush1.bf16.msra.mxu0 0
    %187 = vmatprep.subr.bf16.mxu0 0
    %188 = vmatpush1.bf16.msra.mxu0 0
    %189 = vmatprep.subr.bf16.mxu0 0
    %190 = vmatpush1.bf16.msra.mxu0 0
    %191 = vmatprep.subr.bf16.mxu0 0
    %192 = vmatpush1.bf16.msra.mxu0 0
    %193 = vmatprep.subr.bf16.mxu0 0
    %194 = vmatpush1.bf16.msra.mxu0 0
    %195 = vmatprep.subr.bf16.mxu0 0
    %196 = vmatpush1.bf16.msra.mxu0 0
    %197 = vmatprep.subr.bf16.mxu0 0
    %198 = vmatpush1.bf16.msra.mxu0 0
    %199 = vmatprep.subr.bf16.mxu0 0
    %200 = vmatpush1.bf16.msra.mxu0 0
    %201 = vmatprep.subr.bf16.mxu0 0
    %202 = vmatpush1.bf16.msra.mxu0 0
    %203 = vmatprep.subr.bf16.mxu0 0
    %204 = vmatpush1.bf16.msra.mxu0 0
    %205 = vmatprep.mubr.bf16.mxu0 0
    %206 = vmatmul.mubr.bf16.gmra.mrb[0].mxu0 %v171
    %v207 = vpop.f32.mrb[0].mxu0
    %v208 = vadd.f32 0.0, %v207
    %v209 = vpop.f32.mrb[0].mxu0
    %v210 = vpop.f32.mrb[0].mxu0
    %v211 = vadd.f32 0.0, %v210
    %v212 = vpop.f32.mrb[0].mxu0
    %213 = vdwg.mxu0
    %v214 = vmul.f32 %v164, %v106
    %v215 = vmul.f32 %v167, %v107
    %v216 = vmul.f32 %v208, %v108
    %v217 = vmul.f32 %v211, %v109
    %v218 = vpack.c.bf16 %v215, %v214
    %v219 = vpack.c.bf16 %v217, %v216
    %v220 = vld [vmem:[#allocation7] sm:$0xff]
    %v221 = vld [vmem:[#allocation7 + $0x8] sm:$0xff]
    %v222 = vld [vmem:[#allocation7 + $0x10] sm:$0xff]
    %v223 = vld [vmem:[#allocation7 + $0x18] sm:$0xff]
    %v224 = vld [vmem:[#allocation7 + $0x20] sm:$0xff]
    %v225 = vld [vmem:[#allocation7 + $0x28] sm:$0xff]
    %v226 = vld [vmem:[#allocation7 + $0x30] sm:$0xff]
    %v227 = vld [vmem:[#allocation7 + $0x38] sm:$0xff]
    %v228 = vld [vmem:[%s3] sm:$0xff]
    %v230 = vlaneseq
    %v231 = vshrl.u32 %v230, 7
    %v232 = vsub.s32 0, %v231
    %v233 = vrot.slane %v228, %v232
    %v234 = vlaneseq
    %v235 = vshrl.u32 %v234, 7
    %v236 = vsub.s32 1, %v235
    %v237 = vrot.slane %v228, %v236
    %v238 = vlaneseq
    %v239 = vshrl.u32 %v238, 7
    %v240 = vsub.s32 2, %v239
    %v241 = vrot.slane %v228, %v240
    %v242 = vlaneseq
    %v243 = vshrl.u32 %v242, 7
    %v244 = vsub.s32 3, %v243
    %v245 = vrot.slane %v228, %v244
    %v246 = vlaneseq
    %v247 = vshrl.u32 %v246, 7
    %v248 = vsub.s32 4, %v247
    %v249 = vrot.slane %v228, %v248
    %v250 = vlaneseq
    %v251 = vshrl.u32 %v250, 7
    %v252 = vsub.s32 5, %v251
    %v253 = vrot.slane %v228, %v252
    %v254 = vlaneseq
    %v255 = vshrl.u32 %v254, 7
    %v256 = vsub.s32 6, %v255
    %v257 = vrot.slane %v228, %v256
    %v258 = vlaneseq
    %v259 = vshrl.u32 %v258, 7
    %v260 = vsub.s32 7, %v259
    %v261 = vrot.slane %v228, %v260
    %v278 = vunpack.c.l.b16 %v220
    %v279 = vunpack.c.h.b16 %v220
    %v280 = vunpack.c.l.b16 %v221
    %v281 = vunpack.c.h.b16 %v221
    %v282 = vunpack.c.l.b16 %v222
    %v283 = vunpack.c.h.b16 %v222
    %v284 = vunpack.c.l.b16 %v223
    %v285 = vunpack.c.h.b16 %v223
    %v286 = vunpack.c.l.b16 %v224
    %v287 = vunpack.c.h.b16 %v224
    %v288 = vunpack.c.l.b16 %v225
    %v289 = vunpack.c.h.b16 %v225
    %v290 = vunpack.c.l.b16 %v226
    %v291 = vunpack.c.h.b16 %v226
    %v292 = vunpack.c.l.b16 %v227
    %v293 = vunpack.c.h.b16 %v227
    %v294 = vpack.c.b16 %v286, %v278
    %v295 = vpack.c.b16 %v287, %v279
    %v296 = vpack.c.b16 %v288, %v280
    %v297 = vpack.c.b16 %v289, %v281
    %v298 = vpack.c.b16 %v290, %v282
    %v299 = vpack.c.b16 %v291, %v283
    %v300 = vpack.c.b16 %v292, %v284
    %v301 = vpack.c.b16 %v293, %v285
    %v311 = vsel %vm93, %v218, 0
    %v314 = vsel %vm93, %v219, 0
    %316 = vmatprep.subr.bf16.mxu0 %v295
    %317 = vmatpush1.bf16.msra.mxu0 %v294
    %318 = vmatprep.subr.bf16.mxu0 0
    %319 = vmatpush1.bf16.msra.mxu0 0
    %320 = vmatprep.subr.bf16.mxu0 0
    %321 = vmatpush1.bf16.msra.mxu0 0
    %322 = vmatprep.subr.bf16.mxu0 0
    %323 = vmatpush1.bf16.msra.mxu0 0
    %324 = vmatprep.subr.bf16.mxu0 0
    %325 = vmatpush1.bf16.msra.mxu0 0
    %326 = vmatprep.subr.bf16.mxu0 0
    %327 = vmatpush1.bf16.msra.mxu0 0
    %328 = vmatprep.subr.bf16.mxu0 0
    %329 = vmatpush1.bf16.msra.mxu0 0
    %330 = vmatprep.subr.bf16.mxu0 0
    %331 = vmatpush1.bf16.msra.mxu0 0
    %332 = vmatprep.subr.bf16.mxu0 0
    %333 = vmatpush1.bf16.msra.mxu0 0
    %334 = vmatprep.subr.bf16.mxu0 0
    %335 = vmatpush1.bf16.msra.mxu0 0
    %336 = vmatprep.subr.bf16.mxu0 0
    %337 = vmatpush1.bf16.msra.mxu0 0
    %338 = vmatprep.subr.bf16.mxu0 0
    %339 = vmatpush1.bf16.msra.mxu0 0
    %340 = vmatprep.subr.bf16.mxu0 0
    %341 = vmatpush1.bf16.msra.mxu0 0
    %342 = vmatprep.subr.bf16.mxu0 0
    %343 = vmatpush1.bf16.msra.mxu0 0
    %344 = vmatprep.subr.bf16.mxu0 0
    %345 = vmatpush1.bf16.msra.mxu0 0
    %346 = vmatprep.subr.bf16.mxu0 0
    %347 = vmatpush1.bf16.msra.mxu0 0
    %348 = vmatprep.mubr.bf16.mxu0 0
    %349 = vmatmul.mubr.bf16.gmra.mrb[0].mxu0 %v311
    %v350 = vpop.f32.mrb[0].mxu0
    %v351 = vadd.f32 %v233, %v350
    %v352 = vpop.f32.mrb[0].mxu0
    %v353 = vadd.f32 %v237, %v352
    %v354 = vpop.f32.mrb[0].mxu0
    %v355 = vadd.f32 %v233, %v354
    %v356 = vpop.f32.mrb[0].mxu0
    %v357 = vadd.f32 %v237, %v356
    %358 = vmatprep.mubr.bf16.mxu0 0
    %359 = vmatmul.mubr.bf16.gmra.mrb[0].mxu0 %v314
    %v360 = vpop.f32.mrb[0].mxu0
    %v361 = vadd.f32 %v233, %v360
    %v362 = vpop.f32.mrb[0].mxu0
    %v363 = vadd.f32 %v237, %v362
    %v364 = vpop.f32.mrb[0].mxu0
    %v365 = vadd.f32 %v233, %v364
    %v366 = vpop.f32.mrb[0].mxu0
    %v367 = vadd.f32 %v237, %v366
    %368 = vdwg.mxu0
    %369 = vmatprep.subr.bf16.mxu0 %v297
    %370 = vmatpush1.bf16.msra.mxu0 %v296
    %371 = vmatprep.subr.bf16.mxu0 0
    %372 = vmatpush1.bf16.msra.mxu0 0
    %373 = vmatprep.subr.bf16.mxu0 0
    %374 = vmatpush1.bf16.msra.mxu0 0
    %375 = vmatprep.subr.bf16.mxu0 0
    %376 = vmatpush1.bf16.msra.mxu0 0
    %377 = vmatprep.subr.bf16.mxu0 0
    %378 = vmatpush1.bf16.msra.mxu0 0
    %379 = vmatprep.subr.bf16.mxu0 0
    %380 = vmatpush1.bf16.msra.mxu0 0
    %381 = vmatprep.subr.bf16.mxu0 0
    %382 = vmatpush1.bf16.msra.mxu0 0
    %383 = vmatprep.subr.bf16.mxu0 0
    %384 = vmatpush1.bf16.msra.mxu0 0
    %385 = vmatprep.subr.bf16.mxu0 0
    %386 = vmatpush1.bf16.msra.mxu0 0
    %387 = vmatprep.subr.bf16.mxu0 0
    %388 = vmatpush1.bf16.msra.mxu0 0
    %389 = vmatprep.subr.bf16.mxu0 0
    %390 = vmatpush1.bf16.msra.mxu0 0
    %391 = vmatprep.subr.bf16.mxu0 0
    %392 = vmatpush1.bf16.msra.mxu0 0
    %393 = vmatprep.subr.bf16.mxu0 0
    %394 = vmatpush1.bf16.msra.mxu0 0
    %395 = vmatprep.subr.bf16.mxu0 0
    %396 = vmatpush1.bf16.msra.mxu0 0
    %397 = vmatprep.subr.bf16.mxu0 0
    %398 = vmatpush1.bf16.msra.mxu0 0
    %399 = vmatprep.subr.bf16.mxu0 0
    %400 = vmatpush1.bf16.msra.mxu0 0
    %401 = vmatprep.mubr.bf16.mxu0 0
    %402 = vmatmul.mubr.bf16.gmra.mrb[0].mxu0 %v311
    %v403 = vpop.f32.mrb[0].mxu0
    %v404 = vadd.f32 %v241, %v403
    %v405 = vpop.f32.mrb[0].mxu0
    %v406 = vadd.f32 %v245, %v405
    %v407 = vpop.f32.mrb[0].mxu0
    %v408 = vadd.f32 %v241, %v407
    %v409 = vpop.f32.mrb[0].mxu0
    %v410 = vadd.f32 %v245, %v409
    %411 = vmatprep.mubr.bf16.mxu0 0
    %412 = vmatmul.mubr.bf16.gmra.mrb[0].mxu0 %v314
    %v413 = vpop.f32.mrb[0].mxu0
    %v414 = vadd.f32 %v241, %v413
    %v415 = vpop.f32.mrb[0].mxu0
    %v416 = vadd.f32 %v245, %v415
    %v417 = vpop.f32.mrb[0].mxu0
    %v418 = vadd.f32 %v241, %v417
    %v419 = vpop.f32.mrb[0].mxu0
    %v420 = vadd.f32 %v245, %v419
    %421 = vdwg.mxu0
    %422 = vmatprep.subr.bf16.mxu0 %v299
    %423 = vmatpush1.bf16.msra.mxu0 %v298
    %424 = vmatprep.subr.bf16.mxu0 0
    %425 = vmatpush1.bf16.msra.mxu0 0
    %426 = vmatprep.subr.bf16.mxu0 0
    %427 = vmatpush1.bf16.msra.mxu0 0
    %428 = vmatprep.subr.bf16.mxu0 0
    %429 = vmatpush1.bf16.msra.mxu0 0
    %430 = vmatprep.subr.bf16.mxu0 0
    %431 = vmatpush1.bf16.msra.mxu0 0
    %432 = vmatprep.subr.bf16.mxu0 0
    %433 = vmatpush1.bf16.msra.mxu0 0
    %434 = vmatprep.subr.bf16.mxu0 0
    %435 = vmatpush1.bf16.msra.mxu0 0
    %436 = vmatprep.subr.bf16.mxu0 0
    %437 = vmatpush1.bf16.msra.mxu0 0
    %438 = vmatprep.subr.bf16.mxu0 0
    %439 = vmatpush1.bf16.msra.mxu0 0
    %440 = vmatprep.subr.bf16.mxu0 0
    %441 = vmatpush1.bf16.msra.mxu0 0
    %442 = vmatprep.subr.bf16.mxu0 0
    %443 = vmatpush1.bf16.msra.mxu0 0
    %444 = vmatprep.subr.bf16.mxu0 0
    %445 = vmatpush1.bf16.msra.mxu0 0
    %446 = vmatprep.subr.bf16.mxu0 0
    %447 = vmatpush1.bf16.msra.mxu0 0
    %448 = vmatprep.subr.bf16.mxu0 0
    %449 = vmatpush1.bf16.msra.mxu0 0
    %450 = vmatprep.subr.bf16.mxu0 0
    %451 = vmatpush1.bf16.msra.mxu0 0
    %452 = vmatprep.subr.bf16.mxu0 0
    %453 = vmatpush1.bf16.msra.mxu0 0
    %454 = vmatprep.mubr.bf16.mxu0 0
    %455 = vmatmul.mubr.bf16.gmra.mrb[0].mxu0 %v311
    %v456 = vpop.f32.mrb[0].mxu0
    %v457 = vadd.f32 %v249, %v456
    %v458 = vpop.f32.mrb[0].mxu0
    %v459 = vadd.f32 %v253, %v458
    %v460 = vpop.f32.mrb[0].mxu0
    %v461 = vadd.f32 %v249, %v460
    %v462 = vpop.f32.mrb[0].mxu0
    %v463 = vadd.f32 %v253, %v462
    %464 = vmatprep.mubr.bf16.mxu0 0
    %465 = vmatmul.mubr.bf16.gmra.mrb[0].mxu0 %v314
    %v466 = vpop.f32.mrb[0].mxu0
    %v467 = vadd.f32 %v249, %v466
    %v468 = vpop.f32.mrb[0].mxu0
    %v469 = vadd.f32 %v253, %v468
    %v470 = vpop.f32.mrb[0].mxu0
    %v471 = vadd.f32 %v249, %v470
    %v472 = vpop.f32.mrb[0].mxu0
    %v473 = vadd.f32 %v253, %v472
    %474 = vdwg.mxu0
    %475 = vmatprep.subr.bf16.mxu0 %v301
    %476 = vmatpush1.bf16.msra.mxu0 %v300
    %477 = vmatprep.subr.bf16.mxu0 0
    %478 = vmatpush1.bf16.msra.mxu0 0
    %479 = vmatprep.subr.bf16.mxu0 0
    %480 = vmatpush1.bf16.msra.mxu0 0
    %481 = vmatprep.subr.bf16.mxu0 0
    %482 = vmatpush1.bf16.msra.mxu0 0
    %483 = vmatprep.subr.bf16.mxu0 0
    %484 = vmatpush1.bf16.msra.mxu0 0
    %485 = vmatprep.subr.bf16.mxu0 0
    %486 = vmatpush1.bf16.msra.mxu0 0
    %487 = vmatprep.subr.bf16.mxu0 0
    %488 = vmatpush1.bf16.msra.mxu0 0
    %489 = vmatprep.subr.bf16.mxu0 0
    %490 = vmatpush1.bf16.msra.mxu0 0
    %491 = vmatprep.subr.bf16.mxu0 0
    %492 = vmatpush1.bf16.msra.mxu0 0
    %493 = vmatprep.subr.bf16.mxu0 0
    %494 = vmatpush1.bf16.msra.mxu0 0
    %495 = vmatprep.subr.bf16.mxu0 0
    %496 = vmatpush1.bf16.msra.mxu0 0
    %497 = vmatprep.subr.bf16.mxu0 0
    %498 = vmatpush1.bf16.msra.mxu0 0
    %499 = vmatprep.subr.bf16.mxu0 0
    %500 = vmatpush1.bf16.msra.mxu0 0
    %501 = vmatprep.subr.bf16.mxu0 0
    %502 = vmatpush1.bf16.msra.mxu0 0
    %503 = vmatprep.subr.bf16.mxu0 0
    %504 = vmatpush1.bf16.msra.mxu0 0
    %505 = vmatprep.subr.bf16.mxu0 0
    %506 = vmatpush1.bf16.msra.mxu0 0
    %507 = vmatprep.mubr.bf16.mxu0 0
    %508 = vmatmul.mubr.bf16.gmra.mrb[0].mxu0 %v311
    %v509 = vpop.f32.mrb[0].mxu0
    %v510 = vadd.f32 %v257, %v509
    %v511 = vpop.f32.mrb[0].mxu0
    %v512 = vadd.f32 %v261, %v511
    %v513 = vpop.f32.mrb[0].mxu0
    %v514 = vadd.f32 %v257, %v513
    %v515 = vpop.f32.mrb[0].mxu0
    %v516 = vadd.f32 %v261, %v515
    %517 = vmatprep.mubr.bf16.mxu0 0
    %518 = vmatmul.mubr.bf16.gmra.mrb[0].mxu0 %v314
    %v519 = vpop.f32.mrb[0].mxu0
    %v520 = vadd.f32 %v257, %v519
    %v521 = vpop.f32.mrb[0].mxu0
    %v522 = vadd.f32 %v261, %v521
    %v523 = vpop.f32.mrb[0].mxu0
    %v524 = vadd.f32 %v257, %v523
    %v525 = vpop.f32.mrb[0].mxu0
    %v526 = vadd.f32 %v261, %v525
    %527 = vdwg.mxu0
    %v528 = vld [vmem:[#allocation9] sm:$0xff]
    %v529 = vadd.f32 %v351, %v355
    %v530 = vadd.f32 %v529, %v361
    %v531 = vadd.f32 %v530, %v365
    %v532 = vrot.slane %v531, 4
    %v533 = vadd.f32 %v531, %v532
    %v534 = vrot.slane %v533, 2
    %v535 = vadd.f32 %v533, %v534
    %v536 = vrot.slane %v535, 1
    %v537 = vadd.f32 %v535, %v536
    %v538 = vadd.f32 %v353, %v357
    %v539 = vadd.f32 %v538, %v363
    %v540 = vadd.f32 %v539, %v367
    %v541 = vrot.slane %v540, 4
    %v542 = vadd.f32 %v540, %v541
    %v543 = vrot.slane %v542, 2
    %v544 = vadd.f32 %v542, %v543
    %v545 = vrot.slane %v544, 1
    %v546 = vadd.f32 %v544, %v545
    %v547 = vadd.f32 %v404, %v408
    %v548 = vadd.f32 %v547, %v414
    %v549 = vadd.f32 %v548, %v418
    %v550 = vrot.slane %v549, 4
    %v551 = vadd.f32 %v549, %v550
    %v552 = vrot.slane %v551, 2
    %v553 = vadd.f32 %v551, %v552
    %v554 = vrot.slane %v553, 1
    %v555 = vadd.f32 %v553, %v554
    %v556 = vadd.f32 %v406, %v410
    %v557 = vadd.f32 %v556, %v416
    %v558 = vadd.f32 %v557, %v420
    %v559 = vrot.slane %v558, 4
    %v560 = vadd.f32 %v558, %v559
    %v561 = vrot.slane %v560, 2
    %v562 = vadd.f32 %v560, %v561
    %v563 = vrot.slane %v562, 1
    %v564 = vadd.f32 %v562, %v563
    %v565 = vadd.f32 %v457, %v461
    %v566 = vadd.f32 %v565, %v467
    %v567 = vadd.f32 %v566, %v471
    %v568 = vrot.slane %v567, 4
    %v569 = vadd.f32 %v567, %v568
    %v570 = vrot.slane %v569, 2
    %v571 = vadd.f32 %v569, %v570
    %v572 = vrot.slane %v571, 1
    %v573 = vadd.f32 %v571, %v572
    %v574 = vadd.f32 %v459, %v463
    %v575 = vadd.f32 %v574, %v469
    %v576 = vadd.f32 %v575, %v473
    %v577 = vrot.slane %v576, 4
    %v578 = vadd.f32 %v576, %v577
    %v579 = vrot.slane %v578, 2
    %v580 = vadd.f32 %v578, %v579
    %v581 = vrot.slane %v580, 1
    %v582 = vadd.f32 %v580, %v581
    %v583 = vadd.f32 %v510, %v514
    %v584 = vadd.f32 %v583, %v520
    %v585 = vadd.f32 %v584, %v524
    %v586 = vrot.slane %v585, 4
    %v587 = vadd.f32 %v585, %v586
    %v588 = vrot.slane %v587, 2
    %v589 = vadd.f32 %v587, %v588
    %v590 = vrot.slane %v589, 1
    %v591 = vadd.f32 %v589, %v590
    %v592 = vadd.f32 %v512, %v516
    %v593 = vadd.f32 %v592, %v522
    %v594 = vadd.f32 %v593, %v526
    %v595 = vrot.slane %v594, 4
    %v596 = vadd.f32 %v594, %v595
    %v597 = vrot.slane %v596, 2
    %v598 = vadd.f32 %v596, %v597
    %v599 = vrot.slane %v598, 1
    %v600 = vadd.f32 %v598, %v599
    %v609 = vcombine.low %v537, %v546
    %v610 = vcombine.low %v555, %v564
    %v611 = vcombine.low %v573, %v582
    %v612 = vcombine.low %v591, %v600
    %v614 = vunpack.c.l.s4 1966171168
    %v615 = vunpack.c.0.s8 %v614
    %v616 = vlaneseq
    %v617 = vshrl.u32 %v616, 7
    %v618 = vsub.s32 %v615, %v617
    %v619 = vrot.slane %v609, %v618
    %v621 = vunpack.c.l.s4 1966171168
    %v622 = vunpack.c.0.s8 %v621
    %v623 = vlaneseq
    %v624 = vshrl.u32 %v623, 7
    %v625 = vsub.s32 %v622, %v624
    %v626 = vrot.slane %v610, %v625
    %v628 = vunpack.c.l.s4 1966171168
    %v629 = vunpack.c.0.s8 %v628
    %v630 = vlaneseq
    %v631 = vshrl.u32 %v630, 7
    %v632 = vsub.s32 %v629, %v631
    %v633 = vrot.slane %v611, %v632
    %v635 = vunpack.c.l.s4 1966171168
    %v636 = vunpack.c.0.s8 %v635
    %v637 = vlaneseq
    %v638 = vshrl.u32 %v637, 7
    %v639 = vsub.s32 %v636, %v638
    %v640 = vrot.slane %v612, %v639
    %v641 = vcombine.low %v619, %v626
    %v642 = vcombine.low %v633, %v640
    %v644 = vunpack.c.l.s4 1966171168
    %v645 = vunpack.c.0.s8 %v644
    %v646 = vlaneseq
    %v647 = vshrl.u32 %v646, 7
    %v648 = vsub.s32 %v645, %v647
    %v649 = vrot.slane %v641, %v648
    %v651 = vunpack.c.l.s4 1966171168
    %v652 = vunpack.c.0.s8 %v651
    %v653 = vlaneseq
    %v654 = vshrl.u32 %v653, 7
    %v655 = vsub.s32 %v652, %v654
    %v656 = vrot.slane %v642, %v655
    %v657 = vcombine.low %v649, %v656
    %v659 = vadd.f32 %v528, %v657
    %660 = vst [vmem:[#allocation9] sm:$0xff] %v659
    %v661 = vld [vmem:[#allocation11] sm:$0xff]
    %v662 = vmul.f32 %v351, %v351
    %v663 = vmul.f32 %v353, %v353
    %v664 = vmul.f32 %v404, %v404
    %v665 = vmul.f32 %v406, %v406
    %v666 = vmul.f32 %v457, %v457
    %v667 = vmul.f32 %v459, %v459
    %v668 = vmul.f32 %v510, %v510
    %v669 = vmul.f32 %v512, %v512
    %v670 = vmul.f32 %v355, %v355
    %v671 = vmul.f32 %v357, %v357
    %v672 = vmul.f32 %v408, %v408
    %v673 = vmul.f32 %v410, %v410
    %v674 = vmul.f32 %v461, %v461
    %v675 = vmul.f32 %v463, %v463
    %v676 = vmul.f32 %v514, %v514
    %v677 = vmul.f32 %v516, %v516
    %v678 = vmul.f32 %v361, %v361
    %v679 = vmul.f32 %v363, %v363
    %v680 = vmul.f32 %v414, %v414
    %v681 = vmul.f32 %v416, %v416
    %v682 = vmul.f32 %v467, %v467
    %v683 = vmul.f32 %v469, %v469
    %v684 = vmul.f32 %v520, %v520
    %v685 = vmul.f32 %v522, %v522
    %v686 = vmul.f32 %v365, %v365
    %v687 = vmul.f32 %v367, %v367
    %v688 = vmul.f32 %v418, %v418
    %v689 = vmul.f32 %v420, %v420
    %v690 = vmul.f32 %v471, %v471
    %v691 = vmul.f32 %v473, %v473
    %v692 = vmul.f32 %v524, %v524
    %v693 = vmul.f32 %v526, %v526
    %v694 = vadd.f32 %v662, %v670
    %v695 = vadd.f32 %v694, %v678
    %v696 = vadd.f32 %v695, %v686
    %v697 = vrot.slane %v696, 4
    %v698 = vadd.f32 %v696, %v697
    %v699 = vrot.slane %v698, 2
    %v700 = vadd.f32 %v698, %v699
    %v701 = vrot.slane %v700, 1
    %v702 = vadd.f32 %v700, %v701
    %v703 = vadd.f32 %v663, %v671
    %v704 = vadd.f32 %v703, %v679
    %v705 = vadd.f32 %v704, %v687
    %v706 = vrot.slane %v705, 4
    %v707 = vadd.f32 %v705, %v706
    %v708 = vrot.slane %v707, 2
    %v709 = vadd.f32 %v707, %v708
    %v710 = vrot.slane %v709, 1
    %v711 = vadd.f32 %v709, %v710
    %v712 = vadd.f32 %v664, %v672
    %v713 = vadd.f32 %v712, %v680
    %v714 = vadd.f32 %v713, %v688
    %v715 = vrot.slane %v714, 4
    %v716 = vadd.f32 %v714, %v715
    %v717 = vrot.slane %v716, 2
    %v718 = vadd.f32 %v716, %v717
    %v719 = vrot.slane %v718, 1
    %v720 = vadd.f32 %v718, %v719
    %v721 = vadd.f32 %v665, %v673
    %v722 = vadd.f32 %v721, %v681
    %v723 = vadd.f32 %v722, %v689
    %v724 = vrot.slane %v723, 4
    %v725 = vadd.f32 %v723, %v724
    %v726 = vrot.slane %v725, 2
    %v727 = vadd.f32 %v725, %v726
    %v728 = vrot.slane %v727, 1
    %v729 = vadd.f32 %v727, %v728
    %v730 = vadd.f32 %v666, %v674
    %v731 = vadd.f32 %v730, %v682
    %v732 = vadd.f32 %v731, %v690
    %v733 = vrot.slane %v732, 4
    %v734 = vadd.f32 %v732, %v733
    %v735 = vrot.slane %v734, 2
    %v736 = vadd.f32 %v734, %v735
    %v737 = vrot.slane %v736, 1
    %v738 = vadd.f32 %v736, %v737
    %v739 = vadd.f32 %v667, %v675
    %v740 = vadd.f32 %v739, %v683
    %v741 = vadd.f32 %v740, %v691
    %v742 = vrot.slane %v741, 4
    %v743 = vadd.f32 %v741, %v742
    %v744 = vrot.slane %v743, 2
    %v745 = vadd.f32 %v743, %v744
    %v746 = vrot.slane %v745, 1
    %v747 = vadd.f32 %v745, %v746
    %v748 = vadd.f32 %v668, %v676
    %v749 = vadd.f32 %v748, %v684
    %v750 = vadd.f32 %v749, %v692
    %v751 = vrot.slane %v750, 4
    %v752 = vadd.f32 %v750, %v751
    %v753 = vrot.slane %v752, 2
    %v754 = vadd.f32 %v752, %v753
    %v755 = vrot.slane %v754, 1
    %v756 = vadd.f32 %v754, %v755
    %v757 = vadd.f32 %v669, %v677
    %v758 = vadd.f32 %v757, %v685
    %v759 = vadd.f32 %v758, %v693
    %v760 = vrot.slane %v759, 4
    %v761 = vadd.f32 %v759, %v760
    %v762 = vrot.slane %v761, 2
    %v763 = vadd.f32 %v761, %v762
    %v764 = vrot.slane %v763, 1
    %v765 = vadd.f32 %v763, %v764
    %v774 = vcombine.low %v702, %v711
    %v775 = vcombine.low %v720, %v729
    %v776 = vcombine.low %v738, %v747
    %v777 = vcombine.low %v756, %v765
    %v779 = vunpack.c.l.s4 1966171168
    %v780 = vunpack.c.0.s8 %v779
    %v781 = vlaneseq
    %v782 = vshrl.u32 %v781, 7
    %v783 = vsub.s32 %v780, %v782
    %v784 = vrot.slane %v774, %v783
    %v786 = vunpack.c.l.s4 1966171168
    %v787 = vunpack.c.0.s8 %v786
    %v788 = vlaneseq
    %v789 = vshrl.u32 %v788, 7
    %v790 = vsub.s32 %v787, %v789
    %v791 = vrot.slane %v775, %v790
    %v793 = vunpack.c.l.s4 1966171168
    %v794 = vunpack.c.0.s8 %v793
    %v795 = vlaneseq
    %v796 = vshrl.u32 %v795, 7
    %v797 = vsub.s32 %v794, %v796
    %v798 = vrot.slane %v776, %v797
    %v800 = vunpack.c.l.s4 1966171168
    %v801 = vunpack.c.0.s8 %v800
    %v802 = vlaneseq
    %v803 = vshrl.u32 %v802, 7
    %v804 = vsub.s32 %v801, %v803
    %v805 = vrot.slane %v777, %v804
    %v806 = vcombine.low %v784, %v791
    %v807 = vcombine.low %v798, %v805
    %v809 = vunpack.c.l.s4 1966171168
    %v810 = vunpack.c.0.s8 %v809
    %v811 = vlaneseq
    %v812 = vshrl.u32 %v811, 7
    %v813 = vsub.s32 %v810, %v812
    %v814 = vrot.slane %v806, %v813
    %v816 = vunpack.c.l.s4 1966171168
    %v817 = vunpack.c.0.s8 %v816
    %v818 = vlaneseq
    %v819 = vshrl.u32 %v818, 7
    %v820 = vsub.s32 %v817, %v819
    %v821 = vrot.slane %v807, %v820
    %v822 = vcombine.low %v814, %v821
    %v824 = vadd.f32 %v661, %v822
    %825 = vst [vmem:[#allocation11] sm:$0xff] %v824
    %v826 = vpack.c.bf16 %v355, %v351
    %v827 = vpack.c.bf16 %v357, %v353
    %v828 = vpack.c.bf16 %v408, %v404
    %v829 = vpack.c.bf16 %v410, %v406
    %v830 = vpack.c.bf16 %v461, %v457
    %v831 = vpack.c.bf16 %v463, %v459
    %v832 = vpack.c.bf16 %v514, %v510
    %v833 = vpack.c.bf16 %v516, %v512
    %v834 = vpack.c.bf16 %v365, %v361
    %v835 = vpack.c.bf16 %v367, %v363
    %v836 = vpack.c.bf16 %v418, %v414
    %v837 = vpack.c.bf16 %v420, %v416
    %v838 = vpack.c.bf16 %v471, %v467
    %v839 = vpack.c.bf16 %v473, %v469
    %v840 = vpack.c.bf16 %v524, %v520
    %v841 = vpack.c.bf16 %v526, %v522
    %v858 = vunpack.c.l.b16 %v826
    %v859 = vunpack.c.l.b16 %v827
    %v860 = vunpack.c.l.b16 %v828
    %v861 = vunpack.c.l.b16 %v829
    %v862 = vunpack.c.l.b16 %v830
    %v863 = vunpack.c.l.b16 %v831
    %v864 = vunpack.c.l.b16 %v832
    %v865 = vunpack.c.l.b16 %v833
    %v866 = vunpack.c.h.b16 %v826
    %v867 = vunpack.c.h.b16 %v827
    %v868 = vunpack.c.h.b16 %v828
    %v869 = vunpack.c.h.b16 %v829
    %v870 = vunpack.c.h.b16 %v830
    %v871 = vunpack.c.h.b16 %v831
    %v872 = vunpack.c.h.b16 %v832
    %v873 = vunpack.c.h.b16 %v833
    %v874 = vunpack.c.l.b16 %v834
    %v875 = vunpack.c.l.b16 %v835
    %v876 = vunpack.c.l.b16 %v836
    %v877 = vunpack.c.l.b16 %v837
    %v878 = vunpack.c.l.b16 %v838
    %v879 = vunpack.c.l.b16 %v839
    %v880 = vunpack.c.l.b16 %v840
    %v881 = vunpack.c.l.b16 %v841
    %v882 = vunpack.c.h.b16 %v834
    %v883 = vunpack.c.h.b16 %v835
    %v884 = vunpack.c.h.b16 %v836
    %v885 = vunpack.c.h.b16 %v837
    %v886 = vunpack.c.h.b16 %v838
    %v887 = vunpack.c.h.b16 %v839
    %v888 = vunpack.c.h.b16 %v840
    %v889 = vunpack.c.h.b16 %v841
    %v890 = vpack.c.b16 %v859, %v858
    %v891 = vpack.c.b16 %v861, %v860
    %v892 = vpack.c.b16 %v863, %v862
    %v893 = vpack.c.b16 %v865, %v864
    %v894 = vpack.c.b16 %v867, %v866
    %v895 = vpack.c.b16 %v869, %v868
    %v896 = vpack.c.b16 %v871, %v870
    %v897 = vpack.c.b16 %v873, %v872
    %v898 = vpack.c.b16 %v875, %v874
    %v899 = vpack.c.b16 %v877, %v876
    %v900 = vpack.c.b16 %v879, %v878
    %v901 = vpack.c.b16 %v881, %v880
    %v902 = vpack.c.b16 %v883, %v882
    %v903 = vpack.c.b16 %v885, %v884
    %v904 = vpack.c.b16 %v887, %v886
    %v905 = vpack.c.b16 %v889, %v888
    %922 = vst [vmem:[#allocation8] sm:$0xff] %v890
    %923 = vst [vmem:[#allocation8 + $0x8] sm:$0xff] %v891
    %924 = vst [vmem:[#allocation8 + $0x10] sm:$0xff] %v892
    %925 = vst [vmem:[#allocation8 + $0x18] sm:$0xff] %v893
    %926 = vst [vmem:[#allocation8 + $0x20] sm:$0xff] %v894
    %927 = vst [vmem:[#allocation8 + $0x28] sm:$0xff] %v895
    %928 = vst [vmem:[#allocation8 + $0x30] sm:$0xff] %v896
    %929 = vst [vmem:[#allocation8 + $0x38] sm:$0xff] %v897
    %930 = vst [vmem:[#allocation8 + $0x40] sm:$0xff] %v898
    %931 = vst [vmem:[#allocation8 + $0x48] sm:$0xff] %v899
    %932 = vst [vmem:[#allocation8 + $0x50] sm:$0xff] %v900
    %933 = vst [vmem:[#allocation8 + $0x58] sm:$0xff] %v901
    %934 = vst [vmem:[#allocation8 + $0x60] sm:$0xff] %v902
    %935 = vst [vmem:[#allocation8 + $0x68] sm:$0xff] %v903
    %936 = vst [vmem:[#allocation8 + $0x70] sm:$0xff] %v904
    %937 = vst [vmem:[#allocation8 + $0x78] sm:$0xff] %v905
    // Predicated region
    $region34: #{tpu_custom_call.1} parent=1 // pred_check
      _
    $region35: #{tpu_custom_call.1} parent=1 // pred_check_branch
      %939 = sbr.rel (0) target = $region37
    $region36: #{tpu_custom_call.1} parent=1 // pred_region
      %s941 = ssub.s32 2048, 2048
      %942 = vsyncadd [#allocation4], %s941
      %s943 = sshll.u32 [#allocation8], 4
      %s944 = int_to_ptr.vmem [resolvable:$true] %s943
      %949 = dma.vmem_to_hbm [thread:$0]  %s944, 2048, %s4, [#allocation4], 512, 512, 32
    $region37: #{tpu_custom_call.1} parent=1 // pred_fallthru
      _
    // Predicated region
    $region38: #{tpu_custom_call.1} parent=1 // pred_check
      _
    $region39: #{tpu_custom_call.1} parent=1 // pred_check_branch
      %951 = sbr.rel (0) target = $region41
    $region40: #{tpu_custom_call.1} parent=1 // pred_region
      %s953 = ssub.s32 128, 128
      %954 = vsyncadd [#allocation10], %s953
      %s956 = sshll.u32 [#allocation9], 4
      %s957 = int_to_ptr.vmem [resolvable:$true] %s956
      %959 = dma.vmem_to_hbm [thread:$0]  %s957, 128, %s5, [#allocation10]
    $region41: #{tpu_custom_call.1} parent=1 // pred_fallthru
      _
    // Predicated region
    $region42: #{tpu_custom_call.1} parent=1 // pred_check
      _
    $region43: #{tpu_custom_call.1} parent=1 // pred_check_branch
      %961 = sbr.rel (0) target = $region45
    $region44: #{tpu_custom_call.1} parent=1 // pred_region
      %s963 = ssub.s32 128, 128
      %964 = vsyncadd [#allocation10], %s963
      %s966 = sshll.u32 [#allocation11], 4
      %s967 = int_to_ptr.vmem [resolvable:$true] %s966
      %969 = dma.vmem_to_hbm [thread:$0]  %s967, 128, %s6, [#allocation10]
    $region45: #{tpu_custom_call.1} parent=1 // pred_fallthru
      _
    // Predicated region
    $region46: #{tpu_custom_call.1} parent=1 // pred_check
      _
    $region47: #{tpu_custom_call.1} parent=1 // pred_check_branch
      %971 = sbr.rel (0) target = $region49
    $region48: #{tpu_custom_call.1} parent=1 // pred_region
      %972 = dma.done [#allocation4], 2048
    $region49: #{tpu_custom_call.1} parent=1 // pred_fallthru
      _
    // Predicated region
    $region50: #{tpu_custom_call.1} parent=1 // pred_check
      _
    $region51: #{tpu_custom_call.1} parent=1 // pred_check_branch
      %974 = sbr.rel (0) target = $region53
    $region52: #{tpu_custom_call.1} parent=1 // pred_region
      %975 = dma.done [#allocation10], 128
    $region53: #{tpu_custom_call.1} parent=1 // pred_fallthru
      _
    // Predicated region
    $region54: #{tpu_custom_call.1} parent=1 // pred_check
      _
    $region55: #{tpu_custom_call.1} parent=1 // pred_check_branch
      %977 = sbr.rel (0) target = $region57
    $region56: #{tpu_custom_call.1} parent=1 // pred_region
      %978 = dma.done [#allocation10], 128
    $region57: #{tpu_custom_call.1} parent=1 // pred_fallthru
      _
    %979 = vsyncpa [#allocation3], 1
    %980 = vsyncpa [#allocation6], 1
    %981 = vsyncpa [#allocation4], 1
    %982 = vsyncpa [#allocation10], 1

</llo_original>
